<compile_context>
chip_gen: v5e
topology: v5e:2x2
jax: 0.10.0
libtpu: 0.0.40
codegen_flags: <defaults>
</compile_context>

<pallas_src>
import jax
import jax.numpy as jnp
from jax.experimental import pallas as pl
from jax.experimental.pallas import tpu as pltpu


# ----------------------------------------------------------------------------
# Kernels
# ----------------------------------------------------------------------------
def _group_stats_kernel(x_ref, psum_ref, psumsq_ref):
    """Accumulate per-(batch*group, channel) sum and sum-of-squares.

    x_ref:      (1, cpg, hw_tile)   one spatial tile of one (batch, group)
    psum_ref:   (1, cpg, 1)         accumulator output (resident across tiles)
    psumsq_ref: (1, cpg, 1)
    """
    t = pl.program_id(1)

    @pl.when(t == 0)
    def _():
        psum_ref[...] = jnp.zeros_like(psum_ref)
        psumsq_ref[...] = jnp.zeros_like(psumsq_ref)

    # Single pass over the tile: sum and sum of squares, accumulated in f32.
    x = x_ref[...].astype(jnp.float32)
    psum_ref[...] += jnp.sum(x, axis=-1, keepdims=True)
    psumsq_ref[...] += jnp.sum(x * x, axis=-1, keepdims=True)


def _apply_kernel(x_ref, a_ref, b_ref, o_ref):
    """Fused normalize + adaptive affine:  out = x * a + b  (per-row a, b).

    x_ref: (row_tile, hw_tile)   a_ref/b_ref: (row_tile, 1)
    """
    # NOTE: for bf16 inputs on v6e/v7x this could stay in bf16 (bf16 VALU) to
    # halve vreg/VMEM pressure; f32 is kept here to match reference numerics.
    x = x_ref[...].astype(jnp.float32)
    o_ref[...] = (x * a_ref[...] + b_ref[...]).astype(o_ref.dtype)


# ----------------------------------------------------------------------------
# Tiling helper
# ----------------------------------------------------------------------------
def _pick_tile(n, unit, max_tile):
    """Largest multiple of `unit` that divides n and is <= max_tile.

    Falls back to the full extent n (always a legal block) if n <= max_tile or
    no aligned divisor exists.
    """
    if n <= max_tile:
        return n
    best = None
    t = unit
    while t <= max_tile:
        if n % t == 0:
            best = t
        t += unit
    return best if best is not None else n


# ----------------------------------------------------------------------------
# Wrapper
# ----------------------------------------------------------------------------
def patch_ada_group_norm(x, emb, weight, bias, num_groups, eps=1e-5):
    """x: [B, C, H, W], emb: [B, E], weight: [2C, E], bias: [2C]."""
    B, C, H, W = x.shape
    G = num_groups
    assert C % G == 0
    cpg = C // G
    HW = H * W
    BG = B * G
    rows = B * C

    # TODO(synk): apply get_activation(act_fn) to emb when act_fn is not None.
    # TODO(synk): world_size > 1 patch parallelism (all_gather of heights and
    #             partial group sums) is not implemented; this is the
    #             world_size == 1 path.

    vmem_limit = 32 * 1024 * 1024  # safe on v5e/v6e/v7x

    # ---- Pass 1: per-(batch, group) statistics (Pallas, tiled over HW) -----
    x_g = x.reshape(BG, cpg, HW)  # contiguous view, lane-dense last dim
    # block <= ~4 MiB f32  (2x double-buffered input => <= ~8 MiB VMEM)
    hw_tile_s = _pick_tile(HW, 128, max(128, (1 << 20) // max(cpg, 1)))
    n_hw_s = HW // hw_tile_s

    psum, psumsq = pl.pallas_call(
        _group_stats_kernel,
        out_shape=(
            jax.ShapeDtypeStruct((BG, cpg, 1), jnp.float32),
            jax.ShapeDtypeStruct((BG, cpg, 1), jnp.float32),
        ),
        grid=(BG, n_hw_s),
        in_specs=[pl.BlockSpec((1, cpg, hw_tile_s), lambda bg, t: (bg, 0, t))],
        out_specs=(
            pl.BlockSpec((1, cpg, 1), lambda bg, t: (bg, 0, 0)),
            pl.BlockSpec((1, cpg, 1), lambda bg, t: (bg, 0, 0)),
        ),
        compiler_params=pltpu.CompilerParams(
            dimension_semantics=("parallel", "arbitrary"),
            vmem_limit_bytes=vmem_limit,
        ),
    )(x_g)

    # ---- Tiny O(B*C) glue in XLA: finish stats, fold adaLN affine ----------
    n_elem = jnp.float32(cpg * HW)
    sums = psum[:, :, 0].sum(axis=1)            # (BG,)
    sumsqs = psumsq[:, :, 0].sum(axis=1)        # (BG,)
    mean = sums / n_elem
    var = jnp.maximum(sumsqs / n_elem - mean * mean, 0.0)
    inv_std = jax.lax.rsqrt(var + jnp.float32(eps))

    # Linear(emb) -> scale, shift.  [B,E] x [E,2C] with tiny B: leave to XLA.
    emb_out = (
        emb.astype(jnp.float32) @ weight.astype(jnp.float32).T
        + bias.astype(jnp.float32)
    )
    scale = emb_out[:, :C]                      # (B, C)
    shift = emb_out[:, C:]                      # (B, C)

    mean_c = jnp.repeat(mean.reshape(B, G), cpg, axis=1)      # (B, C)
    inv_c = jnp.repeat(inv_std.reshape(B, G), cpg, axis=1)    # (B, C)
    a_bc = inv_c * (1.0 + scale)                               # (B, C)
    b_bc = shift - mean_c * a_bc                               # (B, C)
    a = a_bc.reshape(rows, 1)
    b = b_bc.reshape(rows, 1)

    # ---- Pass 2: lane-dense fused multiply-add (Pallas, fully parallel) ----
    x2 = x.reshape(rows, HW)  # contiguous view
    row_tile = _pick_tile(rows, 8, 256)
    # block <= ~2 MiB f32 => in+out double-buffered <= ~8 MiB VMEM
    hw_tile = _pick_tile(HW, 128, max(128, (1 << 19) // max(row_tile, 1)))
    grid = (rows // row_tile, HW // hw_tile)

    # NOTE: input_output_aliases={0: 0} could alias x2 to the output to halve
    # HBM footprint for large latents if the caller allows donating x.
    out2 = pl.pallas_call(
        _apply_kernel,
        out_shape=jax.ShapeDtypeStruct((rows, HW), x.dtype),
        grid=grid,
        in_specs=[
            pl.BlockSpec((row_tile, hw_tile), lambda i, j: (i, j)),
            pl.BlockSpec((row_tile, 1), lambda i, j: (i, 0)),
            pl.BlockSpec((row_tile, 1), lambda i, j: (i, 0)),
        ],
        out_specs=pl.BlockSpec((row_tile, hw_tile), lambda i, j: (i, j)),
        compiler_params=pltpu.CompilerParams(
            dimension_semantics=("parallel", "parallel"),
            vmem_limit_bytes=vmem_limit,
        ),
    )(x2, a, b)

    return out2.reshape(B, C, H, W)


# ----------------------------------------------------------------------------
# Pure-JAX reference (world_size == 1 semantics of the PyTorch module)
# ----------------------------------------------------------------------------
def _reference(x, emb, weight, bias, num_groups, eps=1e-5):
    B, C, H, W = x.shape
    emb_out = emb @ weight.T + bias
    scale = emb_out[:, :C].reshape(B, C, 1, 1)
    shift = emb_out[:, C:].reshape(B, C, 1, 1)
    xg = x.reshape(B, num_groups, -1)
    mean = xg.mean(-1, keepdims=True)
    var = ((xg - mean) ** 2).mean(-1, keepdims=True)
    xn = ((xg - mean) / jnp.sqrt(var + eps)).reshape(B, C, H, W)
    return xn * (1.0 + scale) + shift


if __name__ == "__main__":
    B, C, H, W = 2, 4, 16, 16      # x: NCHW, out_dim = C = 4
    E = 32                         # embedding_dim
    G = 2                          # num_groups

    key = jax.random.PRNGKey(0)
    k1, k2, k3, k4 = jax.random.split(key, 4)
    x = jax.random.normal(k1, (B, C, H, W), dtype=jnp.float32)
    emb = jax.random.normal(k2, (B, E), dtype=jnp.float32)
    # Deterministic synthetic nn.Linear(embedding_dim, out_dim * 2) parameters.
    weight = 0.05 * jax.random.normal(k3, (2 * C, E), dtype=jnp.float32)
    bias = 0.05 * jax.random.normal(k4, (2 * C,), dtype=jnp.float32)

    out = patch_ada_group_norm(x, emb, weight, bias, num_groups=G, eps=1e-5)
    jax.block_until_ready(out)

    ref = _reference(x, emb, weight, bias, num_groups=G, eps=1e-5)
    assert out.shape == (B, C, H, W) and out.dtype == x.dtype
    assert jnp.allclose(out, ref, rtol=1e-4, atol=1e-4), float(
        jnp.max(jnp.abs(out - ref))
    )
    print("KERNEL_OK")
</pallas_src>

<mosaic_0001>
module attributes {stable_mosaic.version = 11 : i64} {
  func.func @_group_stats_kernel(%arg0: i32, %arg1: i32, %arg2: memref<1x2x256xf32, #tpu.memory_space<vmem>>, %arg3: memref<1x2x1xf32, #tpu.memory_space<vmem>>, %arg4: memref<1x2x1xf32, #tpu.memory_space<vmem>>) attributes {dimension_semantics = [#tpu.dimension_semantics<parallel>, #tpu.dimension_semantics<arbitrary>], iteration_bounds = array<i64: 4, 1>, scalar_prefetch = 0 : i64, scratch_operands = 0 : i64, tpu.core_type = #tpu.core_type<tc>, window_params = [{transform_indices = @transform_0, window_bounds = array<i64: 1, 2, 256>}, {transform_indices = @transform_1, window_bounds = array<i64: 1, 2, 1>}, {transform_indices = @transform_2, window_bounds = array<i64: 1, 2, 1>}]} {
    %c0_i32 = arith.constant 0 : i32
    %0 = arith.cmpi eq, %arg1, %c0_i32 : i32
    %1 = arith.extui %0 : i1 to i32
    %c0_i32_0 = arith.constant 0 : i32
    %2 = arith.cmpi ne, %1, %c0_i32_0 : i32
    scf.if %2 {
      %cst_16 = arith.constant 0.000000e+00 : f32
      %15 = vector.broadcast %cst_16 : f32 to vector<1x2x1xf32>
      %c0_17 = arith.constant 0 : index
      %c0_18 = arith.constant 0 : index
      %c0_19 = arith.constant 0 : index
      %16 = vector.load %arg3[%c0_17, %c0_18, %c0_19] : memref<1x2x1xf32, #tpu.memory_space<vmem>>, vector<1x2x1xf32>
      tpu.vector_store %arg3[%c0_17, %c0_18, %c0_19], %15 {strides = array<i32>} : memref<1x2x1xf32, #tpu.memory_space<vmem>>, vector<1x2x1xf32>,
      %cst_20 = arith.constant 0.000000e+00 : f32
      %17 = vector.broadcast %cst_20 : f32 to vector<1x2x1xf32>
      %c0_21 = arith.constant 0 : index
      %c0_22 = arith.constant 0 : index
      %c0_23 = arith.constant 0 : index
      %18 = vector.load %arg4[%c0_21, %c0_22, %c0_23] : memref<1x2x1xf32, #tpu.memory_space<vmem>>, vector<1x2x1xf32>
      tpu.vector_store %arg4[%c0_21, %c0_22, %c0_23], %17 {strides = array<i32>} : memref<1x2x1xf32, #tpu.memory_space<vmem>>, vector<1x2x1xf32>,
    } else {
    }
    %c0 = arith.constant 0 : index
    %c0_1 = arith.constant 0 : index
    %c0_2 = arith.constant 0 : index
    %3 = vector.load %arg2[%c0, %c0_1, %c0_2] : memref<1x2x256xf32, #tpu.memory_space<vmem>>, vector<1x2x256xf32>
    %c0_3 = arith.constant 0 : index
    %c0_4 = arith.constant 0 : index
    %c0_5 = arith.constant 0 : index
    %4 = vector.load %arg3[%c0_3, %c0_4, %c0_5] : memref<1x2x1xf32, #tpu.memory_space<vmem>>, vector<1x2x1xf32>
    %cst = arith.constant dense<0.000000e+00> : vector<1x2xf32>
    %5 = vector.multi_reduction <add>, %3, %cst [2] : vector<1x2x256xf32> to vector<1x2xf32>
    %6 = vector.shape_cast %5 : vector<1x2xf32> to vector<1x2x1xf32>
    %7 = arith.addf %4, %6 : vector<1x2x1xf32>
    %c0_6 = arith.constant 0 : index
    %c0_7 = arith.constant 0 : index
    %c0_8 = arith.constant 0 : index
    %8 = vector.load %arg3[%c0_6, %c0_7, %c0_8] : memref<1x2x1xf32, #tpu.memory_space<vmem>>, vector<1x2x1xf32>
    tpu.vector_store %arg3[%c0_6, %c0_7, %c0_8], %7 {strides = array<i32>} : memref<1x2x1xf32, #tpu.memory_space<vmem>>, vector<1x2x1xf32>,
    %c0_9 = arith.constant 0 : index
    %c0_10 = arith.constant 0 : index
    %c0_11 = arith.constant 0 : index
    %9 = vector.load %arg4[%c0_9, %c0_10, %c0_11] : memref<1x2x1xf32, #tpu.memory_space<vmem>>, vector<1x2x1xf32>
    %10 = arith.mulf %3, %3 : vector<1x2x256xf32>
    %cst_12 = arith.constant dense<0.000000e+00> : vector<1x2xf32>
    %11 = vector.multi_reduction <add>, %10, %cst_12 [2] : vector<1x2x256xf32> to vector<1x2xf32>
    %12 = vector.shape_cast %11 : vector<1x2xf32> to vector<1x2x1xf32>
    %13 = arith.addf %9, %12 : vector<1x2x1xf32>
    %c0_13 = arith.constant 0 : index
    %c0_14 = arith.constant 0 : index
    %c0_15 = arith.constant 0 : index
    %14 = vector.load %arg4[%c0_13, %c0_14, %c0_15] : memref<1x2x1xf32, #tpu.memory_space<vmem>>, vector<1x2x1xf32>
    tpu.vector_store %arg4[%c0_13, %c0_14, %c0_15], %13 {strides = array<i32>} : memref<1x2x1xf32, #tpu.memory_space<vmem>>, vector<1x2x1xf32>,
    return
  }
  func.func @transform_0(%arg0: i32, %arg1: i32) -> (i32, i32, i32) {
    %c0_i32 = arith.constant 0 : i32
    %c0_i32_0 = arith.constant 0 : i32
    return %arg0, %c0_i32, %arg1 : i32, i32, i32
  }
  func.func @transform_1(%arg0: i32, %arg1: i32) -> (i32, i32, i32) {
    %c0_i32 = arith.constant 0 : i32
    %c0_i32_0 = arith.constant 0 : i32
    %c0_i32_1 = arith.constant 0 : i32
    return %arg0, %c0_i32, %c0_i32_0 : i32, i32, i32
  }
  func.func @transform_2(%arg0: i32, %arg1: i32) -> (i32, i32, i32) {
    %c0_i32 = arith.constant 0 : i32
    %c0_i32_0 = arith.constant 0 : i32
    %c0_i32_1 = arith.constant 0 : i32
    return %arg0, %c0_i32, %c0_i32_0 : i32, i32, i32
  }
}

</mosaic_0001>

<llo_original>
// kernel: tpu_custom_call.1
$region0: #{tpu_custom_call.1}
  #allocation0 [shape = 'u32[]', space=smem, size = 0x4, offset = 0x4, fixed_abs, tag = 'smem constant byte address 0x4 - core index']
  #allocation1 [shape = 'u32[72,128]{1,0:T(1,128)}', space=vmem, size = 0x9000, scoped, tag = 'internal scratch']
  %s0 = inlined_call_operand.hbm [shape: f32[4,2,256], index: 0, kind: input, shape index: {}]
  %s1 = inlined_call_operand.vmem [shape: f32[4,2,1], index: 1, kind: output, shape index: {0}]
  %s2 = inlined_call_operand.vmem [shape: f32[4,2,1], index: 2, kind: output, shape index: {1}]
  %3 = xla_tuple %s1, %s2
  %s4 = sld [smem:[#allocation0]]
  $region53: #{tpu_custom_call.1} parent=0
    _
  %s6 = ssub.s32 1, %s4
  %s7 = scalar_select 0, %s6, %s4
  $region1: #{tpu_custom_call.1} parent=0
    #allocation2 [shape = 'u8[4096]{0}', space=vmem, size = 0x1000, scoped, tag = 'input window, operand 0']
    #allocation3 [shape = 's32[2]{0}', space=sflag, size = 0x8, scoped, tag = 'scoped memory for tpu_custom_call.1']
    %8 = vsyncpa [#allocation3], 0
    %s9 = scalar_lea.sflag [#allocation3], 1
    %10 = vsyncpa %s9, 0
    loop: start=0, step=1, limit=6
    $region2: #{tpu_custom_call.1} parent=1 // loop_pre_header
      _
    $region3: #{tpu_custom_call.1} parent=1 // loop_header
      %s12 = sphi 0, %s16
      %p13 = scmp.ge.s32.totalorder %s12, 6
      %s19 = sphi 0, %s31
      %s20 = sphi 0, %s27
      %s21 = sphi 0, %s19
      %s22 = sphi 0, %s20
      %s23 = sphi 0, %s21
      %s24 = sphi 0, %s22
      %s36 = sphi 0, %s38
      %s39 = sphi 0, %s36
      %s40 = sphi 0, %s39
      %s56 = sphi 0, %s40
      %s62 = sphi 0, %s64
      %s65 = sphi 0, %s62
      %s66 = sphi 0, %s65
      %s82 = sphi 0, %s66
      %s88 = sphi 0, %s90
      %s91 = sphi 0, %s88
      %s92 = sphi 0, %s91
      %s108 = sphi 0, %s92
    $region4: #{tpu_custom_call.1} parent=1 // loop_header_branch
      %15 = sbr.rel (%p13) target = $region8
    $region5: #{tpu_custom_call.1} parent=1 // loop_body
      %s17 = ssub.s32 %s12, 1
      %s18 = ssub.s32 %s12, 2
      %s25 = sadd.s32 1, %s20
      %p26 = scmp.ge.s32.totalorder %s25, 1
      %s27 = scalar_select %p26, 0, %s25
      %s28 = sadd.s32 1, %s19
      %s29 = scalar_select %p26, %s28, %s19
      %p30 = scmp.ge.s32.totalorder %s29, 4
      %s31 = scalar_select %p30, 0, %s29
      %s32 = ssub.s32 %s19, %s31
      %s33 = ssub.s32 %s20, %s27
      %s34 = sor.u32 %s32, %s33
      %p35 = scmp.eq.s32.totalorder %s34, 0
      %s37 = sadd.s32 %s36, 1
      %s38 = scalar_select %p35, %s36, %s37
      %p41 = pneg %p35
      %p42 = scmp.eq.s32.totalorder %s12, 3
      %p43 = por %p41, %p42
      %p44 = scmp.ne.s32.totalorder %s36, %s39
      %p45 = scmp.eq.s32.totalorder %s12, 0
      %p46 = por %p44, %p45
      %p47 = scmp.ne.s32.totalorder %s36, %s39
      %p48 = scmp.eq.s32.totalorder %s17, 3
      %p49 = por %p47, %p48
      %p50 = scmp.ne.s32.totalorder %s39, %s40
      %p51 = scmp.eq.s32.totalorder %s17, 0
      %p52 = por %p50, %p51
      %p53 = scmp.ne.s32.totalorder %s39, %s40
      %p54 = scmp.eq.s32.totalorder %s18, 3
      %p55 = por %p53, %p54
      %p57 = scmp.ne.s32.totalorder %s40, %s56
      %p58 = scmp.eq.s32.totalorder %s18, 0
      %p59 = por %p57, %p58
      %s60 = ssub.s32 %s19, %s31
      %p61 = scmp.eq.s32.totalorder %s60, 0
      %s63 = sadd.s32 %s62, 1
      %s64 = scalar_select %p61, %s62, %s63
      %p67 = pneg %p61
      %p68 = scmp.eq.s32.totalorder %s12, 3
      %p69 = por %p67, %p68
      %p70 = scmp.ne.s32.totalorder %s62, %s65
      %p71 = scmp.eq.s32.totalorder %s12, 0
      %p72 = por %p70, %p71
      %p73 = scmp.ne.s32.totalorder %s62, %s65
      %p74 = scmp.eq.s32.totalorder %s17, 3
      %p75 = por %p73, %p74
      %p76 = scmp.ne.s32.totalorder %s65, %s66
      %p77 = scmp.eq.s32.totalorder %s17, 0
      %p78 = por %p76, %p77
      %p79 = scmp.ne.s32.totalorder %s65, %s66
      %p80 = scmp.eq.s32.totalorder %s18, 3
      %p81 = por %p79, %p80
      %p83 = scmp.ne.s32.totalorder %s66, %s82
      %p84 = scmp.eq.s32.totalorder %s18, 0
      %p85 = por %p83, %p84
      %s86 = ssub.s32 %s19, %s31
      %p87 = scmp.eq.s32.totalorder %s86, 0
      %s89 = sadd.s32 %s88, 1
      %s90 = scalar_select %p87, %s88, %s89
      %p93 = pneg %p87
      %p94 = scmp.eq.s32.totalorder %s12, 3
      %p95 = por %p93, %p94
      %p96 = scmp.ne.s32.totalorder %s88, %s91
      %p97 = scmp.eq.s32.totalorder %s12, 0
      %p98 = por %p96, %p97
      %p99 = scmp.ne.s32.totalorder %s88, %s91
      %p100 = scmp.eq.s32.totalorder %s17, 3
      %p101 = por %p99, %p100
      %p102 = scmp.ne.s32.totalorder %s91, %s92
      %p103 = scmp.eq.s32.totalorder %s17, 0
      %p104 = por %p102, %p103
      %p105 = scmp.ne.s32.totalorder %s91, %s92
      %p106 = scmp.eq.s32.totalorder %s18, 3
      %p107 = por %p105, %p106
      %p109 = scmp.ne.s32.totalorder %s92, %s108
      %p110 = scmp.eq.s32.totalorder %s18, 0
      %p111 = por %p109, %p110
      %p112 = scmp.le.s32.totalorder 1, %s12
      %p113 = scmp.lt.s32.totalorder %s12, 5
      %p114 = pnand %p112, %p113
      %p115 = pneg %p114
      // Predicated region
      $region9: #{tpu_custom_call.1} parent=5 // pred_check
        _
      $region10: #{tpu_custom_call.1} parent=5 // pred_check_branch
        %117 = sbr.rel (%p114) target = $region12
      $region11: #{tpu_custom_call.1} parent=5 // pred_region
        %s118 = ssub.s32 %s12, 1
      $region12: #{tpu_custom_call.1} parent=5 // pred_fallthru
        _
      %p119 = scmp.lt.s32.totalorder %s12, 4
      // Predicated region
      $region13: #{tpu_custom_call.1} parent=5 // pred_check
        %p120 = pneg %p119
      $region14: #{tpu_custom_call.1} parent=5 // pred_check_branch
        %122 = sbr.rel (%p120) target = $region16
      $region15: #{tpu_custom_call.1} parent=5 // pred_region
        // Predicated region
        $region17: #{tpu_custom_call.1} parent=15 // pred_check
          %p123 = pneg %p46
        $region18: #{tpu_custom_call.1} parent=15 // pred_check_branch
          %125 = sbr.rel (%p123) target = $region20
        $region19: #{tpu_custom_call.1} parent=15 // pred_region
          %s126 = sand.u32 %s36, 1
          %s127 = scalar_lea.sflag [#allocation3], %s126
          %s128 = sand.u32 %s36, 1
          %s129 = smul.addr %s128, 4
          %s130 = scalar_lea.vmem [#allocation2], %s129
          %s131 = smul.u32 2, %s20
          %133 = vsyncadd %s127, 0
          %s134 = smul.addr %s19, 2
          %s135 = sadd.s32 %s131, %s134
          %s136 = smul.addr %s135, 2
          %s137 = scalar_lea.hbm %s0, %s136
          %s139 = sshll.u32 %s137, 4
          %s140 = int_to_ptr.hbm [resolvable:$true] %s139
          %s141 = sshll.u32 %s130, 4
          %s142 = int_to_ptr.vmem [resolvable:$true] %s141
          %144 = dma.hbm_to_vmem [thread:$0]  %s140, 64, %s142, %s127
        $region20: #{tpu_custom_call.1} parent=15 // pred_fallthru
          _
      $region16: #{tpu_custom_call.1} parent=5 // pred_fallthru
        _
      %p145 = scmp.le.s32.totalorder 1, %s12
      %p146 = scmp.lt.s32.totalorder %s12, 5
      %p147 = pnand %p145, %p146
      %p148 = pneg %p147
      // Predicated region
      $region21: #{tpu_custom_call.1} parent=5 // pred_check
        _
      $region22: #{tpu_custom_call.1} parent=5 // pred_check_branch
        %150 = sbr.rel (%p147) target = $region24
      $region23: #{tpu_custom_call.1} parent=5 // pred_region
        %s151 = ssub.s32 %s12, 1
        %s152 = sand.u32 %s39, 1
        %s153 = scalar_lea.sflag [#allocation3], %s152
        %s154 = sand.u32 %s39, 1
        %s155 = smul.addr %s154, 4
        %s156 = scalar_lea.vmem [#allocation2], %s155
        // Predicated region
        $region25: #{tpu_custom_call.1} parent=23 // pred_check
          %p157 = pneg %p52
        $region26: #{tpu_custom_call.1} parent=23 // pred_check_branch
          %159 = sbr.rel (%p157) target = $region28
        $region27: #{tpu_custom_call.1} parent=23 // pred_region
          %161 = dma.done %s153, 64
        $region28: #{tpu_custom_call.1} parent=23 // pred_fallthru
          _
        %s162 = sand.u32 %s39, 1
        %s163 = scalar_lea.sflag [#allocation3], %s162
        %s164 = sand.u32 %s39, 1
        %s165 = smul.addr %s164, 4
        %s166 = scalar_lea.vmem [#allocation2], %s165
        %p167 = pneg %p52
        %p168 = pneg %p49
        %p169 = pneg %p78
        %p170 = pneg %p75
        %p171 = scmp.lt.s32.totalorder %s21, 3
        %s172 = scalar_select %p171, %s21, 3
        %s173 = smul.addr %s172, 2
        %s174 = scalar_lea.vmem %s1, %s173
        %p175 = pneg %p104
        %p176 = pneg %p101
        %p177 = scmp.lt.s32.totalorder %s21, 3
        %s178 = scalar_select %p177, %s21, 3
        %s179 = smul.addr %s178, 2
        %s180 = scalar_lea.vmem %s2, %s179
        %s181 = smul.u32 2, %s22
        %p182 = scmp.lt.s32.totalorder %s21, 3
        %s183 = scalar_select %p182, %s21, 3
        %s184 = smul.addr %s183, 2
        %s185 = scalar_lea.vmem %s1, %s184
        %p186 = scmp.lt.s32.totalorder %s21, 3
        %s187 = scalar_select %p186, %s21, 3
        %s188 = smul.addr %s187, 2
        %s189 = scalar_lea.vmem %s2, %s188
        %p190 = scmp.eq.s32.totalorder %s22, 0
        // Predicated region
        $region29: #{tpu_custom_call.1} parent=23 // pred_check
          %p191 = pneg %p190
        $region30: #{tpu_custom_call.1} parent=23 // pred_check_branch
          %193 = sbr.rel (%p191) target = $region32
        $region31: #{tpu_custom_call.1} parent=23 // pred_region
          %vm194 = vcmask 1024
          %195 = vst.msk [vmem:[%s185] sm:$0x3] %vm194, 0.0
          %196 = vst.msk [vmem:[%s189] sm:$0x3] %vm194, 0.0
        $region32: #{tpu_custom_call.1} parent=23 // pred_fallthru
          _
        %v197 = vld [vmem:[%s156] sm:$0xf]
        %v198 = vld [vmem:[%s185] sm:$0x3]
        %200 = vst [vmem:[#allocation1] ss:$4 sm:$0xff] %v197
        %v201 = vld.sshfl [vmem:[#allocation1] sm:$0xff pattern:$0x73625140]
        %v202 = vld.sshfl [vmem:[#allocation1 + $0x8] sm:$0xff pattern:$0x73625140]
        %vm205 = vcmask 1041408
        %v206 = vsel %vm205, %v201, 0.0
        %v207 = vsel %vm205, %v202, 0.0
        %v208 = vadd.f32 %v206, %v207
        %209 = vadd.xlane.f32.xlu0 %v208
        %v210 = vpop.xlane.xlu0 %209
        %v211 = vadd.f32 %v198, %v210
        %vm212 = vcmask 1024
        %213 = vst.msk [vmem:[%s185] sm:$0x3] %vm212, %v211
        %v214 = vld [vmem:[%s189] sm:$0x3]
        %v215 = vmul.f32 %v197, %v197
        %217 = vst [vmem:[#allocation1] ss:$4 sm:$0xff] %v215
        %v218 = vld.sshfl [vmem:[#allocation1] sm:$0xff pattern:$0x73625140]
        %v219 = vld.sshfl [vmem:[#allocation1 + $0x8] sm:$0xff pattern:$0x73625140]
        %v222 = vsel %vm205, %v218, 0.0
        %v223 = vsel %vm205, %v219, 0.0
        %v224 = vadd.f32 %v222, %v223
        %225 = vadd.xlane.f32.xlu0 %v224
        %v226 = vpop.xlane.xlu0 %225
        %v227 = vadd.f32 %v214, %v226
        %228 = vst.msk [vmem:[%s189] sm:$0x3] %vm212, %v227
        %p229 = scmp.lt.s32.totalorder %s21, 3
        %s230 = scalar_select %p229, %s21, 3
        %s231 = smul.addr %s230, 2
        %s232 = scalar_lea.vmem %s1, %s231
        %p233 = scmp.lt.s32.totalorder %s21, 3
        %s234 = scalar_select %p233, %s21, 3
        %s235 = smul.addr %s234, 2
        %s236 = scalar_lea.vmem %s2, %s235
        // Predicated region
        $region33: #{tpu_custom_call.1} parent=23 // pred_check
          %p237 = pneg %p75
        $region34: #{tpu_custom_call.1} parent=23 // pred_check_branch
          %239 = sbr.rel (%p237) target = $region36
        $region35: #{tpu_custom_call.1} parent=23 // pred_region
          _
        $region36: #{tpu_custom_call.1} parent=23 // pred_fallthru
          _
        // Predicated region
        $region37: #{tpu_custom_call.1} parent=23 // pred_check
          %p240 = pneg %p101
        $region38: #{tpu_custom_call.1} parent=23 // pred_check_branch
          %242 = sbr.rel (%p240) target = $region40
        $region39: #{tpu_custom_call.1} parent=23 // pred_region
          _
        $region40: #{tpu_custom_call.1} parent=23 // pred_fallthru
          _
      $region24: #{tpu_custom_call.1} parent=5 // pred_fallthru
        _
      %p243 = scmp.le.s32.totalorder 2, %s12
      // Predicated region
      $region41: #{tpu_custom_call.1} parent=5 // pred_check
        %p244 = pneg %p243
      $region42: #{tpu_custom_call.1} parent=5 // pred_check_branch
        %246 = sbr.rel (%p244) target = $region44
      $region43: #{tpu_custom_call.1} parent=5 // pred_region
        %s247 = ssub.s32 %s12, 2
        // Predicated region
        $region45: #{tpu_custom_call.1} parent=43 // pred_check
          %p248 = pneg %p81
        $region46: #{tpu_custom_call.1} parent=43 // pred_check_branch
          %250 = sbr.rel (%p248) target = $region48
        $region47: #{tpu_custom_call.1} parent=43 // pred_region
          %p251 = scmp.lt.s32.totalorder %s23, 3
          %s252 = scalar_select %p251, %s23, 3
          %s253 = smul.addr %s252, 2
          %s254 = scalar_lea.vmem %s1, %s253
        $region48: #{tpu_custom_call.1} parent=43 // pred_fallthru
          _
        // Predicated region
        $region49: #{tpu_custom_call.1} parent=43 // pred_check
          %p255 = pneg %p107
        $region50: #{tpu_custom_call.1} parent=43 // pred_check_branch
          %257 = sbr.rel (%p255) target = $region52
        $region51: #{tpu_custom_call.1} parent=43 // pred_region
          %p258 = scmp.lt.s32.totalorder %s23, 3
          %s259 = scalar_select %p258, %s23, 3
          %s260 = smul.addr %s259, 2
          %s261 = scalar_lea.vmem %s2, %s260
        $region52: #{tpu_custom_call.1} parent=43 // pred_fallthru
          _
      $region44: #{tpu_custom_call.1} parent=5 // pred_fallthru
        _
    $region6: #{tpu_custom_call.1} parent=1 // loop_footer
      %s16 = sadd.s32 1, %s12
    $region7: #{tpu_custom_call.1} parent=1 // loop_footer_branch
      %11 = sbr.rel target = $region3
    $region8: #{tpu_custom_call.1} parent=1 // loop_exit
      _
    %262 = vsyncpa [#allocation3], 1
    %s263 = scalar_lea.sflag [#allocation3], 1
    %264 = vsyncpa %s263, 1

</llo_original>
